<compile_context>
chip_gen: v7x
topology: tpu7x:2x2x1
jax: 0.10.0
libtpu: 0.0.40
codegen_flags: <defaults>
</compile_context>

<pallas_src>
import jax
import jax.numpy as jnp
from jax.experimental import pallas as pl
from jax.experimental.pallas import tpu as pltpu


# ----------------------------------------------------------------------------
# Pallas kernel: fused 3-layer MLP (Linear + ReLU, Linear + ReLU, Linear -> 1)
# ----------------------------------------------------------------------------
def mlp_kernel(x_ref, w1_ref, b1_ref, w2_ref, b2_ref, w3t_ref, b3_ref, o_ref):
    # Layer 1 (MXU): x @ W1 + b1 -> ReLU, f32 accumulation.
    h = jnp.dot(x_ref[...], w1_ref[...], preferred_element_type=jnp.float32)
    h = jnp.maximum(h + b1_ref[...], 0.0)                   # (bt, H1p) + (1, H1p)
    # Layer 2 (MXU): h @ W2 + b2 -> ReLU.
    h = jnp.dot(h.astype(w2_ref.dtype), w2_ref[...],
                preferred_element_type=jnp.float32)
    h = jnp.maximum(h + b2_ref[...], 0.0)                   # (bt, H2p)
    # Final layer (num_out == 1): VPU multiply + XLU lane reduction instead of
    # a degenerate (H2, 1) MXU matmul; keeps the MXU free for layers 1-2.
    out = jnp.sum(h * w3t_ref[...], axis=-1, keepdims=True) + b3_ref[...]  # (bt, 1)
    # Lane-broadcast into the 128-wide output block so the store is a full,
    # unmasked vst (vs. masked vst.msk for a 1-wide column).
    o_ref[...] = jnp.broadcast_to(out, o_ref.shape).astype(o_ref.dtype)


# ----------------------------------------------------------------------------
# Wrapper: padding, tiling, pallas_call
# ----------------------------------------------------------------------------
def _round_up(x, m):
    return ((x + m - 1) // m) * m


def _pad2(a, rows, cols):
    return jnp.pad(a, ((0, rows - a.shape[0]), (0, cols - a.shape[1])))


def mlp_forward(data, params, *, batch_tile=256, compute_dtype=jnp.float32):
    """Fused MLP forward.

    data: (N, ...) array, flattened to (N, D_in) like MLPModel.forward's
    `data.view(num_data, -1)`.  Returns (N, 1) float32.
    """
    N = data.shape[0]
    x = data.reshape(N, -1)
    D_in = x.shape[1]

    W1, b1 = params["W1"], params["b1"]
    W2, b2 = params["W2"], params["b2"]
    W3, b3 = params["W3"], params["b3"]
    H1, H2 = W1.shape[1], W2.shape[1]
    n_out = W3.shape[1]
    assert n_out == 1, "kernel is specialized to num_out == 1 (module default)"

    # Lane-align all contraction / hidden dims to 128 (zero padding is exact).
    Dp = _round_up(D_in, 128)
    H1p = _round_up(H1, 128)
    H2p = _round_up(H2, 128)

    # Batch tiling: >= 128 rows per tile, pad/cdiv based, and >= 2 grid steps
    # when there is enough work so both v7x TensorCores get a tile.
    n128 = _round_up(max(N, 1), 128)
    bt = _round_up(max(min(batch_tile, n128), 128), 128)
    if n128 // bt < 2 and n128 >= 256:
        bt = _round_up(n128 // 2, 128)
    n_pad = _round_up(N, bt)
    grid_m = n_pad // bt

    cdt = jnp.dtype(compute_dtype)
    x_p = _pad2(x, n_pad, Dp).astype(cdt)
    w1_p = _pad2(W1, Dp, H1p).astype(cdt)
    w2_p = _pad2(W2, H1p, H2p).astype(cdt)
    b1_p = _pad2(b1.reshape(1, -1), 1, H1p).astype(jnp.float32)
    b2_p = _pad2(b2.reshape(1, -1), 1, H2p).astype(jnp.float32)
    w3t_p = _pad2(W3.T, 1, H2p).astype(jnp.float32)  # final layer runs on the VPU in f32
    b3_p = b3.reshape(1, 1).astype(jnp.float32)

    itemsize = cdt.itemsize
    cost = pl.CostEstimate(
        flops=2 * n_pad * (Dp * H1p + H1p * H2p + H2p),
        transcendentals=0,
        bytes_accessed=(n_pad * Dp + Dp * H1p + H1p * H2p) * itemsize
        + (H1p + H2p + H2p + 1) * 4
        + n_pad * 128 * 4,
    )

    full = lambda i: (0, 0)
    out_slab = pl.pallas_call(
        mlp_kernel,
        out_shape=jax.ShapeDtypeStruct((n_pad, 128), jnp.float32),
        grid_spec=pltpu.PrefetchScalarGridSpec(
            num_scalar_prefetch=0,
            grid=(grid_m,),
            in_specs=[
                pl.BlockSpec((bt, Dp), lambda i: (i, 0)),   # x   (batch-tiled)
                pl.BlockSpec((Dp, H1p), full),              # W1  (resident)
                pl.BlockSpec((1, H1p), full),               # b1
                pl.BlockSpec((H1p, H2p), full),              # W2
                pl.BlockSpec((1, H2p), full),               # b2
                pl.BlockSpec((1, H2p), full),               # W3^T (row vector)
                pl.BlockSpec((1, 1), full),                 # b3
            ],
            out_specs=pl.BlockSpec((bt, 128), lambda i: (i, 0)),  # lane-dense slab
        ),
        compiler_params=pltpu.CompilerParams(
            dimension_semantics=("parallel",),
            vmem_limit_bytes=32 * 1024 * 1024,
        ),
        cost_estimate=cost,
    )(x_p, w1_p, b1_p, w2_p, b2_p, w3t_p, b3_p)

    # Slice padded rows / broadcast lanes back to the module's (N, 1) output.
    return out_slab[:N, :1]


# ----------------------------------------------------------------------------
# Deterministic parameter init (mirrors MLPModel.initialize with ReLU gain).
# initialize() zeroes the biases; we use small random biases so the kernel's
# bias path is exercised by the reference check (forward semantics identical).
# ----------------------------------------------------------------------------
def xavier_normal(key, fan_in, fan_out, gain):
    std = gain * jnp.sqrt(2.0 / (fan_in + fan_out))
    return std * jax.random.normal(key, (fan_in, fan_out), dtype=jnp.float32)


def init_params(key, input_dim, layer_widths, num_out):
    relu_gain = jnp.sqrt(2.0)   # nn.init.calculate_gain('relu')
    h1, h2 = layer_widths
    k1, k2, k3, kb1, kb2, kb3 = jax.random.split(key, 6)
    return {
        "W1": xavier_normal(k1, input_dim, h1, relu_gain),
        "b1": 0.1 * jax.random.normal(kb1, (1, h1), dtype=jnp.float32),
        "W2": xavier_normal(k2, h1, h2, relu_gain),
        "b2": 0.1 * jax.random.normal(kb2, (1, h2), dtype=jnp.float32),
        "W3": xavier_normal(k3, h2, num_out, 1.0),          # final layer: gain=1.0
        "b3": 0.1 * jax.random.normal(kb3, (1, num_out), dtype=jnp.float32),
    }


# Pure-JAX reference for the correctness check.
def mlp_ref(x, p):
    h = jnp.maximum(x @ p["W1"] + p["b1"], 0.0)
    h = jnp.maximum(h @ p["W2"] + p["b2"], 0.0)
    return h @ p["W3"] + p["b3"]


if __name__ == "__main__":
    key = jax.random.PRNGKey(0)
    k_data, k_param, k_data2 = jax.random.split(key, 3)

    # MLPModel(input_dim=4*8*8, layer_widths=[128, 64], activation=nn.ReLU(), num_out=1)
    B, C, H, W = 8, 4, 8, 8
    input_dim = C * H * W
    layer_widths = [128, 64]
    num_out = 1

    params = init_params(k_param, input_dim, layer_widths, num_out)

    x_nchw = jax.random.normal(k_data, (B, C, H, W), dtype=jnp.float32)
    x_flat = x_nchw.reshape(B, -1)                 # == data.view(num_data, -1)

    # f32 path: check against the pure-JAX reference.
    out = jax.block_until_ready(mlp_forward(x_nchw, params))
    ref = mlp_ref(x_flat, params)
    assert out.shape == (B, num_out)
    assert jnp.allclose(out, ref, atol=1e-4, rtol=1e-4), "f32 mismatch vs reference"

    # Non-multiple batch exercises the pad/cdiv path and a 2-step grid
    # (two 128-row tiles -> both v7x TensorCores get work).
    x2 = jax.random.normal(k_data2, (200, input_dim), dtype=jnp.float32)
    out2 = jax.block_until_ready(mlp_forward(x2, params))
    assert out2.shape == (200, num_out)
    assert jnp.allclose(out2, mlp_ref(x2, params), atol=1e-4, rtol=1e-4), \
        "padded-batch mismatch vs reference"

    # NOTE: mlp_forward(..., compute_dtype=jnp.bfloat16) gives the v6e/v7x MXU
    # fast path (f32 accumulation); not run here to keep the smoke test short.
    print("KERNEL_OK")
</pallas_src>

<mosaic_0001>
module attributes {stable_mosaic.version = 11 : i64} {
  func.func @mlp_kernel(%arg0: i32, %arg1: memref<128x256xf32, #tpu.memory_space<vmem>>, %arg2: memref<256x128xf32, #tpu.memory_space<vmem>>, %arg3: memref<1x128xf32, #tpu.memory_space<vmem>>, %arg4: memref<128x128xf32, #tpu.memory_space<vmem>>, %arg5: memref<1x128xf32, #tpu.memory_space<vmem>>, %arg6: memref<1x128xf32, #tpu.memory_space<vmem>>, %arg7: memref<1x1xf32, #tpu.memory_space<vmem>>, %arg8: memref<128x128xf32, #tpu.memory_space<vmem>>) attributes {dimension_semantics = [#tpu.dimension_semantics<parallel>], iteration_bounds = array<i64: 1>, scalar_prefetch = 0 : i64, scratch_operands = 0 : i64, tpu.core_type = #tpu.core_type<tc>, window_params = [{transform_indices = @transform_0, window_bounds = array<i64: 128, 256>}, {pipeline_mode = #tpu.pipeline_mode<synchronous>, transform_indices = @transform_1, window_bounds = array<i64: 256, 128>}, {pipeline_mode = #tpu.pipeline_mode<synchronous>, transform_indices = @transform_2, window_bounds = array<i64: 1, 128>}, {pipeline_mode = #tpu.pipeline_mode<synchronous>, transform_indices = @transform_3, window_bounds = array<i64: 128, 128>}, {pipeline_mode = #tpu.pipeline_mode<synchronous>, transform_indices = @transform_4, window_bounds = array<i64: 1, 128>}, {pipeline_mode = #tpu.pipeline_mode<synchronous>, transform_indices = @transform_5, window_bounds = array<i64: 1, 128>}, {pipeline_mode = #tpu.pipeline_mode<synchronous>, transform_indices = @transform_6, window_bounds = array<i64: 1, 1>}, {transform_indices = @transform_7, window_bounds = array<i64: 128, 128>}]} {
    %c0 = arith.constant 0 : index
    %c0_0 = arith.constant 0 : index
    %0 = vector.load %arg1[%c0, %c0_0] : memref<128x256xf32, #tpu.memory_space<vmem>>, vector<128x256xf32>
    %c0_1 = arith.constant 0 : index
    %c0_2 = arith.constant 0 : index
    %1 = vector.load %arg2[%c0_1, %c0_2] : memref<256x128xf32, #tpu.memory_space<vmem>>, vector<256x128xf32>
    %cst = arith.constant dense<0.000000e+00> : vector<128x128xf32>
    %2 = tpu.matmul %0, %1, %cst {dimension_numbers = #tpu.dot_dimension_numbers<[1], [0], [0], [1], [0, 0, 1, 1], [], []>} : vector<128x256xf32>, vector<256x128xf32>, vector<128x128xf32> -> vector<128x128xf32>
    %c0_3 = arith.constant 0 : index
    %c0_4 = arith.constant 0 : index
    %3 = vector.load %arg3[%c0_3, %c0_4] : memref<1x128xf32, #tpu.memory_space<vmem>>, vector<1x128xf32>
    %4 = vector.broadcast %3 : vector<1x128xf32> to vector<128x128xf32>
    %5 = arith.addf %2, %4 : vector<128x128xf32>
    %cst_5 = arith.constant 0.000000e+00 : f32
    %6 = vector.broadcast %cst_5 : f32 to vector<128x128xf32>
    %7 = arith.maximumf %5, %6 : vector<128x128xf32>
    %c0_6 = arith.constant 0 : index
    %c0_7 = arith.constant 0 : index
    %8 = vector.load %arg4[%c0_6, %c0_7] : memref<128x128xf32, #tpu.memory_space<vmem>>, vector<128x128xf32>
    %cst_8 = arith.constant dense<0.000000e+00> : vector<128x128xf32>
    %9 = tpu.matmul %7, %8, %cst_8 {dimension_numbers = #tpu.dot_dimension_numbers<[1], [0], [0], [1], [0, 0, 1, 1], [], []>} : vector<128x128xf32>, vector<128x128xf32>, vector<128x128xf32> -> vector<128x128xf32>
    %c0_9 = arith.constant 0 : index
    %c0_10 = arith.constant 0 : index
    %10 = vector.load %arg5[%c0_9, %c0_10] : memref<1x128xf32, #tpu.memory_space<vmem>>, vector<1x128xf32>
    %11 = vector.broadcast %10 : vector<1x128xf32> to vector<128x128xf32>
    %12 = arith.addf %9, %11 : vector<128x128xf32>
    %cst_11 = arith.constant 0.000000e+00 : f32
    %13 = vector.broadcast %cst_11 : f32 to vector<128x128xf32>
    %14 = arith.maximumf %12, %13 : vector<128x128xf32>
    %c0_12 = arith.constant 0 : index
    %c0_13 = arith.constant 0 : index
    %15 = vector.load %arg6[%c0_12, %c0_13] : memref<1x128xf32, #tpu.memory_space<vmem>>, vector<1x128xf32>
    %16 = vector.broadcast %15 : vector<1x128xf32> to vector<128x128xf32>
    %17 = arith.mulf %14, %16 : vector<128x128xf32>
    %cst_14 = arith.constant dense<0.000000e+00> : vector<128xf32>
    %18 = vector.multi_reduction <add>, %17, %cst_14 [1] : vector<128x128xf32> to vector<128xf32>
    %19 = vector.shape_cast %18 : vector<128xf32> to vector<128x1xf32>
    %c0_15 = arith.constant 0 : index
    %c0_16 = arith.constant 0 : index
    %20 = vector.load %arg7[%c0_15, %c0_16] : memref<1x1xf32, #tpu.memory_space<vmem>>, vector<1x1xf32>
    %21 = vector.broadcast %20 : vector<1x1xf32> to vector<128x1xf32>
    %22 = arith.addf %19, %21 : vector<128x1xf32>
    %23 = vector.shape_cast %22 : vector<128x1xf32> to vector<128x1xf32>
    %24 = vector.broadcast %23 : vector<128x1xf32> to vector<128x128xf32>
    %c0_17 = arith.constant 0 : index
    %c0_18 = arith.constant 0 : index
    %25 = vector.load %arg8[%c0_17, %c0_18] : memref<128x128xf32, #tpu.memory_space<vmem>>, vector<128x128xf32>
    tpu.vector_store %arg8[%c0_17, %c0_18], %24 {strides = array<i32>} : memref<128x128xf32, #tpu.memory_space<vmem>>, vector<128x128xf32>,
    return
  }
  func.func @transform_0(%arg0: i32) -> (i32, i32) {
    %c0_i32 = arith.constant 0 : i32
    %c0_i32_0 = arith.constant 0 : i32
    return %arg0, %c0_i32 : i32, i32
  }
  func.func @transform_1(%arg0: i32) -> (i32, i32) {
    %c0_i32 = arith.constant 0 : i32
    %c0_i32_0 = arith.constant 0 : i32
    %c0_i32_1 = arith.constant 0 : i32
    return %c0_i32, %c0_i32_0 : i32, i32
  }
  func.func @transform_2(%arg0: i32) -> (i32, i32) {
    %c0_i32 = arith.constant 0 : i32
    %c0_i32_0 = arith.constant 0 : i32
    %c0_i32_1 = arith.constant 0 : i32
    return %c0_i32, %c0_i32_0 : i32, i32
  }
  func.func @transform_3(%arg0: i32) -> (i32, i32) {
    %c0_i32 = arith.constant 0 : i32
    %c0_i32_0 = arith.constant 0 : i32
    %c0_i32_1 = arith.constant 0 : i32
    return %c0_i32, %c0_i32_0 : i32, i32
  }
  func.func @transform_4(%arg0: i32) -> (i32, i32) {
    %c0_i32 = arith.constant 0 : i32
    %c0_i32_0 = arith.constant 0 : i32
    %c0_i32_1 = arith.constant 0 : i32
    return %c0_i32, %c0_i32_0 : i32, i32
  }
  func.func @transform_5(%arg0: i32) -> (i32, i32) {
    %c0_i32 = arith.constant 0 : i32
    %c0_i32_0 = arith.constant 0 : i32
    %c0_i32_1 = arith.constant 0 : i32
    return %c0_i32, %c0_i32_0 : i32, i32
  }
  func.func @transform_6(%arg0: i32) -> (i32, i32) {
    %c0_i32 = arith.constant 0 : i32
    %c0_i32_0 = arith.constant 0 : i32
    %c0_i32_1 = arith.constant 0 : i32
    return %c0_i32, %c0_i32_0 : i32, i32
  }
  func.func @transform_7(%arg0: i32) -> (i32, i32) {
    %c0_i32 = arith.constant 0 : i32
    %c0_i32_0 = arith.constant 0 : i32
    return %arg0, %c0_i32 : i32, i32
  }
}

</mosaic_0001>

<llo_original>
// kernel: tpu_custom_call.1
$region0: #{tpu_custom_call.1}
  #allocation0 [shape = 'u32[]', space=smem, size = 0x4, offset = 0x4, fixed_abs, tag = 'smem constant byte address 0x4 - core index']
  #allocation1 [shape = 'u32[144,128]{1,0:T(1,128)}', space=vmem, size = 0x12000, scoped, tag = 'internal scratch']
  #allocation2 [shape = 'f32[1,1]{1,0:T(1,128)S(1)}', space=vmem, size = 0x200, scoped, tag = 'scoped memory for tpu_custom_call.1']
  %s0 = inlined_call_operand.hbm [shape: f32[128,256], index: 0, kind: input, shape index: {}]
  %s1 = inlined_call_operand.hbm [shape: f32[256,128], index: 1, kind: input, shape index: {}]
  %s2 = inlined_call_operand.vmem [shape: f32[1,128], index: 2, kind: input, shape index: {}]
  %s3 = inlined_call_operand.hbm [shape: f32[128,128], index: 3, kind: input, shape index: {}]
  %s4 = inlined_call_operand.vmem [shape: f32[1,128], index: 4, kind: input, shape index: {}]
  %s5 = inlined_call_operand.vmem [shape: f32[1,128], index: 5, kind: input, shape index: {}]
  %s6 = inlined_call_operand.<no memory space> [shape: f32[1,1], index: 6, kind: input, shape index: {}]
  %s7 = inlined_call_operand.hbm [shape: f32[128,128], index: 7, kind: output, shape index: {}]
  %s8 = sld [smem:[#allocation0]]
  $region50: #{tpu_custom_call.1} parent=0
    _
  %s10 = ssub.s32 1, %s8
  %s11 = scalar_select 0, %s10, %s8
  %v12 = vstv %s6
  %13 = vst [vmem:[#allocation2] sm:$0x1] %v12
  $region1: #{tpu_custom_call.1} parent=0
    #allocation3 [shape = 'u8[131072]{0}', space=vmem, size = 0x20000, scoped, tag = 'input window, operand 0, single buffered']
    #allocation4 [shape = 's32[1]{0}', space=sflag, size = 0x4, scoped, tag = 'scoped memory for tpu_custom_call.1']
    #allocation5 [shape = 's32[1]{0}', space=sflag, size = 0x4, scoped, tag = 'scoped memory for tpu_custom_call.1']
    #allocation6 [shape = 'u8[131072]{0}', space=vmem, size = 0x20000, scoped, tag = 'input window, operand 1, single buffered']
    #allocation7 [shape = 's32[1]{0}', space=sflag, size = 0x4, scoped, tag = 'scoped memory for tpu_custom_call.1']
    #allocation8 [shape = 'u8[65536]{0}', space=vmem, size = 0x10000, scoped, tag = 'input window, operand 3, single buffered']
    #allocation9 [shape = 'u8[65536]{0}', space=vmem, size = 0x10000, scoped, tag = 'output window, operand 0, single buffered']
    %14 = vsyncpa [#allocation4], 0
    %15 = vsyncpa [#allocation7], 0
    %16 = vsyncpa [#allocation5], 0
    // Predicated region
    $region2: #{tpu_custom_call.1} parent=1 // pred_check
      _
    $region3: #{tpu_custom_call.1} parent=1 // pred_check_branch
      %18 = sbr.rel (0) target = $region5
    $region4: #{tpu_custom_call.1} parent=1 // pred_region
      %s20 = ssub.s32 4096, 4096
      %21 = vsyncadd [#allocation4], %s20
      %s22 = sshll.u32 [#allocation3], 4
      %s23 = int_to_ptr.vmem [resolvable:$true] %s22
      %28 = dma.hbm_to_vmem [thread:$0]  %s0, 4096, %s23, [#allocation4], 256, 256, 16
    $region5: #{tpu_custom_call.1} parent=1 // pred_fallthru
      _
    // Predicated region
    $region6: #{tpu_custom_call.1} parent=1 // pred_check
      _
    $region7: #{tpu_custom_call.1} parent=1 // pred_check_branch
      %30 = sbr.rel (0) target = $region9
    $region8: #{tpu_custom_call.1} parent=1 // pred_region
      %s32 = ssub.s32 4096, 4096
      %33 = vsyncadd [#allocation7], %s32
      %s34 = sshll.u32 [#allocation6], 4
      %s35 = int_to_ptr.vmem [resolvable:$true] %s34
      %40 = dma.hbm_to_vmem [thread:$0]  %s1, 4096, %s35, [#allocation7], 128, 128, 8
    $region9: #{tpu_custom_call.1} parent=1 // pred_fallthru
      _
    // Predicated region
    $region10: #{tpu_custom_call.1} parent=1 // pred_check
      _
    $region11: #{tpu_custom_call.1} parent=1 // pred_check_branch
      %42 = sbr.rel (0) target = $region13
    $region12: #{tpu_custom_call.1} parent=1 // pred_region
      _
    $region13: #{tpu_custom_call.1} parent=1 // pred_fallthru
      _
    // Predicated region
    $region14: #{tpu_custom_call.1} parent=1 // pred_check
      _
    $region15: #{tpu_custom_call.1} parent=1 // pred_check_branch
      %44 = sbr.rel (0) target = $region17
    $region16: #{tpu_custom_call.1} parent=1 // pred_region
      %s46 = ssub.s32 2048, 2048
      %47 = vsyncadd [#allocation7], %s46
      %s48 = sshll.u32 [#allocation8], 4
      %s49 = int_to_ptr.vmem [resolvable:$true] %s48
      %54 = dma.hbm_to_vmem [thread:$0]  %s3, 2048, %s49, [#allocation7], 128, 128, 8
    $region17: #{tpu_custom_call.1} parent=1 // pred_fallthru
      _
    // Predicated region
    $region18: #{tpu_custom_call.1} parent=1 // pred_check
      _
    $region19: #{tpu_custom_call.1} parent=1 // pred_check_branch
      %56 = sbr.rel (0) target = $region21
    $region20: #{tpu_custom_call.1} parent=1 // pred_region
      _
    $region21: #{tpu_custom_call.1} parent=1 // pred_fallthru
      _
    // Predicated region
    $region22: #{tpu_custom_call.1} parent=1 // pred_check
      _
    $region23: #{tpu_custom_call.1} parent=1 // pred_check_branch
      %58 = sbr.rel (0) target = $region25
    $region24: #{tpu_custom_call.1} parent=1 // pred_region
      _
    $region25: #{tpu_custom_call.1} parent=1 // pred_fallthru
      _
    // Predicated region
    $region26: #{tpu_custom_call.1} parent=1 // pred_check
      _
    $region27: #{tpu_custom_call.1} parent=1 // pred_check_branch
      %60 = sbr.rel (0) target = $region29
    $region28: #{tpu_custom_call.1} parent=1 // pred_region
      _
    $region29: #{tpu_custom_call.1} parent=1 // pred_fallthru
      _
    // Predicated region
    $region30: #{tpu_custom_call.1} parent=1 // pred_check
      _
    $region31: #{tpu_custom_call.1} parent=1 // pred_check_branch
      %62 = sbr.rel (0) target = $region33
    $region32: #{tpu_custom_call.1} parent=1 // pred_region
      %63 = dma.done [#allocation4], 4096
    $region33: #{tpu_custom_call.1} parent=1 // pred_fallthru
      _
    // Predicated region
    $region34: #{tpu_custom_call.1} parent=1 // pred_check
      _
    $region35: #{tpu_custom_call.1} parent=1 // pred_check_branch
      %65 = sbr.rel (0) target = $region37
    $region36: #{tpu_custom_call.1} parent=1 // pred_region
      %66 = dma.done [#allocation7], 4096
    $region37: #{tpu_custom_call.1} parent=1 // pred_fallthru
      _
    // Predicated region
    $region38: #{tpu_custom_call.1} parent=1 // pred_check
      _
    $region39: #{tpu_custom_call.1} parent=1 // pred_check_branch
      %68 = sbr.rel (0) target = $region41
    $region40: #{tpu_custom_call.1} parent=1 // pred_region
      %69 = dma.done [#allocation7], 2048
    $region41: #{tpu_custom_call.1} parent=1 // pred_fallthru
      _
    %v70 = vld [vmem:[#allocation3] sm:$0xff]
    %v71 = vld [vmem:[#allocation3 + $0x8] sm:$0xff]
    %v72 = vld [vmem:[#allocation3 + $0x10] sm:$0xff]
    %v73 = vld [vmem:[#allocation3 + $0x18] sm:$0xff]
    %v74 = vld [vmem:[#allocation3 + $0x20] sm:$0xff]
    %v75 = vld [vmem:[#allocation3 + $0x28] sm:$0xff]
    %v76 = vld [vmem:[#allocation3 + $0x30] sm:$0xff]
    %v77 = vld [vmem:[#allocation3 + $0x38] sm:$0xff]
    %v78 = vld [vmem:[#allocation3 + $0x40] sm:$0xff]
    %v79 = vld [vmem:[#allocation3 + $0x48] sm:$0xff]
    %v80 = vld [vmem:[#allocation3 + $0x50] sm:$0xff]
    %v81 = vld [vmem:[#allocation3 + $0x58] sm:$0xff]
    %v82 = vld [vmem:[#allocation3 + $0x60] sm:$0xff]
    %v83 = vld [vmem:[#allocation3 + $0x68] sm:$0xff]
    %v84 = vld [vmem:[#allocation3 + $0x70] sm:$0xff]
    %v85 = vld [vmem:[#allocation3 + $0x78] sm:$0xff]
    %v86 = vld [vmem:[#allocation3 + $0x80] sm:$0xff]
    %v87 = vld [vmem:[#allocation3 + $0x88] sm:$0xff]
    %v88 = vld [vmem:[#allocation3 + $0x90] sm:$0xff]
    %v89 = vld [vmem:[#allocation3 + $0x98] sm:$0xff]
    %v90 = vld [vmem:[#allocation3 + $0xa0] sm:$0xff]
    %v91 = vld [vmem:[#allocation3 + $0xa8] sm:$0xff]
    %v92 = vld [vmem:[#allocation3 + $0xb0] sm:$0xff]
    %v93 = vld [vmem:[#allocation3 + $0xb8] sm:$0xff]
    %v94 = vld [vmem:[#allocation3 + $0xc0] sm:$0xff]
    %v95 = vld [vmem:[#allocation3 + $0xc8] sm:$0xff]
    %v96 = vld [vmem:[#allocation3 + $0xd0] sm:$0xff]
    %v97 = vld [vmem:[#allocation3 + $0xd8] sm:$0xff]
    %v98 = vld [vmem:[#allocation3 + $0xe0] sm:$0xff]
    %v99 = vld [vmem:[#allocation3 + $0xe8] sm:$0xff]
    %v100 = vld [vmem:[#allocation3 + $0xf0] sm:$0xff]
    %v101 = vld [vmem:[#allocation3 + $0xf8] sm:$0xff]
    %v102 = vld [vmem:[#allocation6] sm:$0xff]
    %v103 = vld [vmem:[#allocation6 + $0x8] sm:$0xff]
    %v104 = vld [vmem:[#allocation6 + $0x10] sm:$0xff]
    %v105 = vld [vmem:[#allocation6 + $0x18] sm:$0xff]
    %v106 = vld [vmem:[#allocation6 + $0x20] sm:$0xff]
    %v107 = vld [vmem:[#allocation6 + $0x28] sm:$0xff]
    %v108 = vld [vmem:[#allocation6 + $0x30] sm:$0xff]
    %v109 = vld [vmem:[#allocation6 + $0x38] sm:$0xff]
    %v110 = vld [vmem:[#allocation6 + $0x40] sm:$0xff]
    %v111 = vld [vmem:[#allocation6 + $0x48] sm:$0xff]
    %v112 = vld [vmem:[#allocation6 + $0x50] sm:$0xff]
    %v113 = vld [vmem:[#allocation6 + $0x58] sm:$0xff]
    %v114 = vld [vmem:[#allocation6 + $0x60] sm:$0xff]
    %v115 = vld [vmem:[#allocation6 + $0x68] sm:$0xff]
    %v116 = vld [vmem:[#allocation6 + $0x70] sm:$0xff]
    %v117 = vld [vmem:[#allocation6 + $0x78] sm:$0xff]
    %v118 = vld [vmem:[#allocation6 + $0x80] sm:$0xff]
    %v119 = vld [vmem:[#allocation6 + $0x88] sm:$0xff]
    %v120 = vld [vmem:[#allocation6 + $0x90] sm:$0xff]
    %v121 = vld [vmem:[#allocation6 + $0x98] sm:$0xff]
    %v122 = vld [vmem:[#allocation6 + $0xa0] sm:$0xff]
    %v123 = vld [vmem:[#allocation6 + $0xa8] sm:$0xff]
    %v124 = vld [vmem:[#allocation6 + $0xb0] sm:$0xff]
    %v125 = vld [vmem:[#allocation6 + $0xb8] sm:$0xff]
    %v126 = vld [vmem:[#allocation6 + $0xc0] sm:$0xff]
    %v127 = vld [vmem:[#allocation6 + $0xc8] sm:$0xff]
    %v128 = vld [vmem:[#allocation6 + $0xd0] sm:$0xff]
    %v129 = vld [vmem:[#allocation6 + $0xd8] sm:$0xff]
    %v130 = vld [vmem:[#allocation6 + $0xe0] sm:$0xff]
    %v131 = vld [vmem:[#allocation6 + $0xe8] sm:$0xff]
    %v132 = vld [vmem:[#allocation6 + $0xf0] sm:$0xff]
    %v133 = vld [vmem:[#allocation6 + $0xf8] sm:$0xff]
    %v134 = vld [vmem:[%s2] sm:$0x1]
    %v136 = vlaneseq
    %v137 = vshrl.u32 %v136, 7
    %v138 = vsub.s32 0, %v137
    %v139 = vrot.slane %v134, %v138
    %141 = vmatprep.subr.mxu0 0.0
    %142 = vmatpush1.msra.mxu0 %v102
    %143 = vmatprep.subr.mxu0 0.0
    %144 = vmatpush1.msra.mxu0 %v103
    %145 = vmatprep.subr.mxu0 0.0
    %146 = vmatpush1.msra.mxu0 %v104
    %147 = vmatprep.subr.mxu0 0.0
    %148 = vmatpush1.msra.mxu0 %v105
    %149 = vmatprep.subr.mxu0 0.0
    %150 = vmatpush1.msra.mxu0 %v106
    %151 = vmatprep.subr.mxu0 0.0
    %152 = vmatpush1.msra.mxu0 %v107
    %153 = vmatprep.subr.mxu0 0.0
    %154 = vmatpush1.msra.mxu0 %v108
    %155 = vmatprep.subr.mxu0 0.0
    %156 = vmatpush1.msra.mxu0 %v109
    %157 = vmatprep.subr.mxu0 0.0
    %158 = vmatpush1.msra.mxu0 %v110
    %159 = vmatprep.subr.mxu0 0.0
    %160 = vmatpush1.msra.mxu0 %v111
    %161 = vmatprep.subr.mxu0 0.0
    %162 = vmatpush1.msra.mxu0 %v112
    %163 = vmatprep.subr.mxu0 0.0
    %164 = vmatpush1.msra.mxu0 %v113
    %165 = vmatprep.subr.mxu0 0.0
    %166 = vmatpush1.msra.mxu0 %v114
    %167 = vmatprep.subr.mxu0 0.0
    %168 = vmatpush1.msra.mxu0 %v115
    %169 = vmatprep.subr.mxu0 0.0
    %170 = vmatpush1.msra.mxu0 %v116
    %171 = vmatprep.subr.mxu0 0.0
    %172 = vmatpush1.msra.mxu0 %v117
    %173 = vmatprep.subr.mxu0 0.0
    %174 = vmatpush1.msra.mxu0 %v118
    %175 = vmatprep.subr.mxu0 0.0
    %176 = vmatpush1.msra.mxu0 %v119
    %177 = vmatprep.subr.mxu0 0.0
    %178 = vmatpush1.msra.mxu0 %v120
    %179 = vmatprep.subr.mxu0 0.0
    %180 = vmatpush1.msra.mxu0 %v121
    %181 = vmatprep.subr.mxu0 0.0
    %182 = vmatpush1.msra.mxu0 %v122
    %183 = vmatprep.subr.mxu0 0.0
    %184 = vmatpush1.msra.mxu0 %v123
    %185 = vmatprep.subr.mxu0 0.0
    %186 = vmatpush1.msra.mxu0 %v124
    %187 = vmatprep.subr.mxu0 0.0
    %188 = vmatpush1.msra.mxu0 %v125
    %189 = vmatprep.subr.mxu0 0.0
    %190 = vmatpush1.msra.mxu0 %v126
    %191 = vmatprep.subr.mxu0 0.0
    %192 = vmatpush1.msra.mxu0 %v127
    %193 = vmatprep.subr.mxu0 0.0
    %194 = vmatpush1.msra.mxu0 %v128
    %195 = vmatprep.subr.mxu0 0.0
    %196 = vmatpush1.msra.mxu0 %v129
    %197 = vmatprep.subr.mxu0 0.0
    %198 = vmatpush1.msra.mxu0 %v130
    %199 = vmatprep.subr.mxu0 0.0
    %200 = vmatpush1.msra.mxu0 %v131
    %201 = vmatprep.subr.mxu0 0.0
    %202 = vmatpush1.msra.mxu0 %v132
    %203 = vmatprep.subr.mxu0 0.0
    %204 = vmatpush1.msra.mxu0 %v133
    %205 = vmatprep.mubr.f32.mxu0 %v71
    %206 = vmatmul.mubr.f32.gmra.mrb[0].mxu0 %v70
    %v207 = vpop.f32.mrb[0].mxu0
    %v208 = vadd.f32 %v139, %v207
    %v209 = vpop.f32.mrb[0].mxu0
    %210 = vmatprep.mubr.f32.mxu0 %v73
    %211 = vmatmul.mubr.f32.gmra.mrb[0].mxu0 %v72
    %v212 = vpop.f32.mrb[0].mxu0
    %v213 = vadd.f32 %v139, %v212
    %v214 = vpop.f32.mrb[0].mxu0
    %215 = vmatprep.mubr.f32.mxu0 %v75
    %216 = vmatmul.mubr.f32.gmra.mrb[0].mxu0 %v74
    %v217 = vpop.f32.mrb[0].mxu0
    %v218 = vadd.f32 %v139, %v217
    %v219 = vpop.f32.mrb[0].mxu0
    %220 = vmatprep.mubr.f32.mxu0 %v77
    %221 = vmatmul.mubr.f32.gmra.mrb[0].mxu0 %v76
    %v222 = vpop.f32.mrb[0].mxu0
    %v223 = vadd.f32 %v139, %v222
    %v224 = vpop.f32.mrb[0].mxu0
    %225 = vmatprep.mubr.f32.mxu0 %v79
    %226 = vmatmul.mubr.f32.gmra.mrb[0].mxu0 %v78
    %v227 = vpop.f32.mrb[0].mxu0
    %v228 = vadd.f32 %v139, %v227
    %v229 = vpop.f32.mrb[0].mxu0
    %230 = vmatprep.mubr.f32.mxu0 %v81
    %231 = vmatmul.mubr.f32.gmra.mrb[0].mxu0 %v80
    %v232 = vpop.f32.mrb[0].mxu0
    %v233 = vadd.f32 %v139, %v232
    %v234 = vpop.f32.mrb[0].mxu0
    %235 = vmatprep.mubr.f32.mxu0 %v83
    %236 = vmatmul.mubr.f32.gmra.mrb[0].mxu0 %v82
    %v237 = vpop.f32.mrb[0].mxu0
    %v238 = vadd.f32 %v139, %v237
    %v239 = vpop.f32.mrb[0].mxu0
    %240 = vmatprep.mubr.f32.mxu0 %v85
    %241 = vmatmul.mubr.f32.gmra.mrb[0].mxu0 %v84
    %v242 = vpop.f32.mrb[0].mxu0
    %v243 = vadd.f32 %v139, %v242
    %v244 = vpop.f32.mrb[0].mxu0
    %245 = vmatprep.mubr.f32.mxu0 %v87
    %246 = vmatmul.mubr.f32.gmra.mrb[0].mxu0 %v86
    %v247 = vpop.f32.mrb[0].mxu0
    %v248 = vadd.f32 %v139, %v247
    %v249 = vpop.f32.mrb[0].mxu0
    %250 = vmatprep.mubr.f32.mxu0 %v89
    %251 = vmatmul.mubr.f32.gmra.mrb[0].mxu0 %v88
    %v252 = vpop.f32.mrb[0].mxu0
    %v253 = vadd.f32 %v139, %v252
    %v254 = vpop.f32.mrb[0].mxu0
    %255 = vmatprep.mubr.f32.mxu0 %v91
    %256 = vmatmul.mubr.f32.gmra.mrb[0].mxu0 %v90
    %v257 = vpop.f32.mrb[0].mxu0
    %v258 = vadd.f32 %v139, %v257
    %v259 = vpop.f32.mrb[0].mxu0
    %260 = vmatprep.mubr.f32.mxu0 %v93
    %261 = vmatmul.mubr.f32.gmra.mrb[0].mxu0 %v92
    %v262 = vpop.f32.mrb[0].mxu0
    %v263 = vadd.f32 %v139, %v262
    %v264 = vpop.f32.mrb[0].mxu0
    %265 = vmatprep.mubr.f32.mxu0 %v95
    %266 = vmatmul.mubr.f32.gmra.mrb[0].mxu0 %v94
    %v267 = vpop.f32.mrb[0].mxu0
    %v268 = vadd.f32 %v139, %v267
    %v269 = vpop.f32.mrb[0].mxu0
    %270 = vmatprep.mubr.f32.mxu0 %v97
    %271 = vmatmul.mubr.f32.gmra.mrb[0].mxu0 %v96
    %v272 = vpop.f32.mrb[0].mxu0
    %v273 = vadd.f32 %v139, %v272
    %v274 = vpop.f32.mrb[0].mxu0
    %275 = vmatprep.mubr.f32.mxu0 %v99
    %276 = vmatmul.mubr.f32.gmra.mrb[0].mxu0 %v98
    %v277 = vpop.f32.mrb[0].mxu0
    %v278 = vadd.f32 %v139, %v277
    %v279 = vpop.f32.mrb[0].mxu0
    %280 = vmatprep.mubr.f32.mxu0 %v101
    %281 = vmatmul.mubr.f32.gmra.mrb[0].mxu0 %v100
    %v282 = vpop.f32.mrb[0].mxu0
    %v283 = vadd.f32 %v139, %v282
    %v284 = vpop.f32.mrb[0].mxu0
    %285 = vdwg.mxu0
    %v286 = vmax.f32 %v208, 0.0
    %v287 = vmax.f32 %v213, 0.0
    %v288 = vmax.f32 %v218, 0.0
    %v289 = vmax.f32 %v223, 0.0
    %v290 = vmax.f32 %v228, 0.0
    %v291 = vmax.f32 %v233, 0.0
    %v292 = vmax.f32 %v238, 0.0
    %v293 = vmax.f32 %v243, 0.0
    %v294 = vmax.f32 %v248, 0.0
    %v295 = vmax.f32 %v253, 0.0
    %v296 = vmax.f32 %v258, 0.0
    %v297 = vmax.f32 %v263, 0.0
    %v298 = vmax.f32 %v268, 0.0
    %v299 = vmax.f32 %v273, 0.0
    %v300 = vmax.f32 %v278, 0.0
    %v301 = vmax.f32 %v283, 0.0
    %v302 = vld [vmem:[#allocation8] sm:$0xff]
    %v303 = vld [vmem:[#allocation8 + $0x8] sm:$0xff]
    %v304 = vld [vmem:[#allocation8 + $0x10] sm:$0xff]
    %v305 = vld [vmem:[#allocation8 + $0x18] sm:$0xff]
    %v306 = vld [vmem:[#allocation8 + $0x20] sm:$0xff]
    %v307 = vld [vmem:[#allocation8 + $0x28] sm:$0xff]
    %v308 = vld [vmem:[#allocation8 + $0x30] sm:$0xff]
    %v309 = vld [vmem:[#allocation8 + $0x38] sm:$0xff]
    %v310 = vld [vmem:[#allocation8 + $0x40] sm:$0xff]
    %v311 = vld [vmem:[#allocation8 + $0x48] sm:$0xff]
    %v312 = vld [vmem:[#allocation8 + $0x50] sm:$0xff]
    %v313 = vld [vmem:[#allocation8 + $0x58] sm:$0xff]
    %v314 = vld [vmem:[#allocation8 + $0x60] sm:$0xff]
    %v315 = vld [vmem:[#allocation8 + $0x68] sm:$0xff]
    %v316 = vld [vmem:[#allocation8 + $0x70] sm:$0xff]
    %v317 = vld [vmem:[#allocation8 + $0x78] sm:$0xff]
    %v318 = vld [vmem:[%s4] sm:$0x1]
    %v320 = vlaneseq
    %v321 = vshrl.u32 %v320, 7
    %v322 = vsub.s32 0, %v321
    %v323 = vrot.slane %v318, %v322
    %325 = vmatprep.subr.mxu0 0.0
    %326 = vmatpush1.msra.mxu0 %v302
    %327 = vmatprep.subr.mxu0 0.0
    %328 = vmatpush1.msra.mxu0 %v303
    %329 = vmatprep.subr.mxu0 0.0
    %330 = vmatpush1.msra.mxu0 %v304
    %331 = vmatprep.subr.mxu0 0.0
    %332 = vmatpush1.msra.mxu0 %v305
    %333 = vmatprep.subr.mxu0 0.0
    %334 = vmatpush1.msra.mxu0 %v306
    %335 = vmatprep.subr.mxu0 0.0
    %336 = vmatpush1.msra.mxu0 %v307
    %337 = vmatprep.subr.mxu0 0.0
    %338 = vmatpush1.msra.mxu0 %v308
    %339 = vmatprep.subr.mxu0 0.0
    %340 = vmatpush1.msra.mxu0 %v309
    %341 = vmatprep.subr.mxu0 0.0
    %342 = vmatpush1.msra.mxu0 %v310
    %343 = vmatprep.subr.mxu0 0.0
    %344 = vmatpush1.msra.mxu0 %v311
    %345 = vmatprep.subr.mxu0 0.0
    %346 = vmatpush1.msra.mxu0 %v312
    %347 = vmatprep.subr.mxu0 0.0
    %348 = vmatpush1.msra.mxu0 %v313
    %349 = vmatprep.subr.mxu0 0.0
    %350 = vmatpush1.msra.mxu0 %v314
    %351 = vmatprep.subr.mxu0 0.0
    %352 = vmatpush1.msra.mxu0 %v315
    %353 = vmatprep.subr.mxu0 0.0
    %354 = vmatpush1.msra.mxu0 %v316
    %355 = vmatprep.subr.mxu0 0.0
    %356 = vmatpush1.msra.mxu0 %v317
    %357 = vmatprep.subr.mxu0 0.0
    %358 = vmatpush1.msra.mxu0 0.0
    %359 = vmatprep.subr.mxu0 0.0
    %360 = vmatpush1.msra.mxu0 0.0
    %361 = vmatprep.subr.mxu0 0.0
    %362 = vmatpush1.msra.mxu0 0.0
    %363 = vmatprep.subr.mxu0 0.0
    %364 = vmatpush1.msra.mxu0 0.0
    %365 = vmatprep.subr.mxu0 0.0
    %366 = vmatpush1.msra.mxu0 0.0
    %367 = vmatprep.subr.mxu0 0.0
    %368 = vmatpush1.msra.mxu0 0.0
    %369 = vmatprep.subr.mxu0 0.0
    %370 = vmatpush1.msra.mxu0 0.0
    %371 = vmatprep.subr.mxu0 0.0
    %372 = vmatpush1.msra.mxu0 0.0
    %373 = vmatprep.subr.mxu0 0.0
    %374 = vmatpush1.msra.mxu0 0.0
    %375 = vmatprep.subr.mxu0 0.0
    %376 = vmatpush1.msra.mxu0 0.0
    %377 = vmatprep.subr.mxu0 0.0
    %378 = vmatpush1.msra.mxu0 0.0
    %379 = vmatprep.subr.mxu0 0.0
    %380 = vmatpush1.msra.mxu0 0.0
    %381 = vmatprep.subr.mxu0 0.0
    %382 = vmatpush1.msra.mxu0 0.0
    %383 = vmatprep.subr.mxu0 0.0
    %384 = vmatpush1.msra.mxu0 0.0
    %385 = vmatprep.subr.mxu0 0.0
    %386 = vmatpush1.msra.mxu0 0.0
    %387 = vmatprep.subr.mxu0 0.0
    %388 = vmatpush1.msra.mxu0 0.0
    %389 = vmatprep.mubr.f32.mxu0 0.0
    %390 = vmatmul.mubr.f32.gmra.mrb[0].mxu0 %v286
    %v391 = vpop.f32.mrb[0].mxu0
    %v392 = vadd.f32 %v323, %v391
    %v393 = vpop.f32.mrb[0].mxu0
    %394 = vmatprep.mubr.f32.mxu0 0.0
    %395 = vmatmul.mubr.f32.gmra.mrb[0].mxu0 %v287
    %v396 = vpop.f32.mrb[0].mxu0
    %v397 = vadd.f32 %v323, %v396
    %v398 = vpop.f32.mrb[0].mxu0
    %399 = vmatprep.mubr.f32.mxu0 0.0
    %400 = vmatmul.mubr.f32.gmra.mrb[0].mxu0 %v288
    %v401 = vpop.f32.mrb[0].mxu0
    %v402 = vadd.f32 %v323, %v401
    %v403 = vpop.f32.mrb[0].mxu0
    %404 = vmatprep.mubr.f32.mxu0 0.0
    %405 = vmatmul.mubr.f32.gmra.mrb[0].mxu0 %v289
    %v406 = vpop.f32.mrb[0].mxu0
    %v407 = vadd.f32 %v323, %v406
    %v408 = vpop.f32.mrb[0].mxu0
    %409 = vmatprep.mubr.f32.mxu0 0.0
    %410 = vmatmul.mubr.f32.gmra.mrb[0].mxu0 %v290
    %v411 = vpop.f32.mrb[0].mxu0
    %v412 = vadd.f32 %v323, %v411
    %v413 = vpop.f32.mrb[0].mxu0
    %414 = vmatprep.mubr.f32.mxu0 0.0
    %415 = vmatmul.mubr.f32.gmra.mrb[0].mxu0 %v291
    %v416 = vpop.f32.mrb[0].mxu0
    %v417 = vadd.f32 %v323, %v416
    %v418 = vpop.f32.mrb[0].mxu0
    %419 = vmatprep.mubr.f32.mxu0 0.0
    %420 = vmatmul.mubr.f32.gmra.mrb[0].mxu0 %v292
    %v421 = vpop.f32.mrb[0].mxu0
    %v422 = vadd.f32 %v323, %v421
    %v423 = vpop.f32.mrb[0].mxu0
    %424 = vmatprep.mubr.f32.mxu0 0.0
    %425 = vmatmul.mubr.f32.gmra.mrb[0].mxu0 %v293
    %v426 = vpop.f32.mrb[0].mxu0
    %v427 = vadd.f32 %v323, %v426
    %v428 = vpop.f32.mrb[0].mxu0
    %429 = vmatprep.mubr.f32.mxu0 0.0
    %430 = vmatmul.mubr.f32.gmra.mrb[0].mxu0 %v294
    %v431 = vpop.f32.mrb[0].mxu0
    %v432 = vadd.f32 %v323, %v431
    %v433 = vpop.f32.mrb[0].mxu0
    %434 = vmatprep.mubr.f32.mxu0 0.0
    %435 = vmatmul.mubr.f32.gmra.mrb[0].mxu0 %v295
    %v436 = vpop.f32.mrb[0].mxu0
    %v437 = vadd.f32 %v323, %v436
    %v438 = vpop.f32.mrb[0].mxu0
    %439 = vmatprep.mubr.f32.mxu0 0.0
    %440 = vmatmul.mubr.f32.gmra.mrb[0].mxu0 %v296
    %v441 = vpop.f32.mrb[0].mxu0
    %v442 = vadd.f32 %v323, %v441
    %v443 = vpop.f32.mrb[0].mxu0
    %444 = vmatprep.mubr.f32.mxu0 0.0
    %445 = vmatmul.mubr.f32.gmra.mrb[0].mxu0 %v297
    %v446 = vpop.f32.mrb[0].mxu0
    %v447 = vadd.f32 %v323, %v446
    %v448 = vpop.f32.mrb[0].mxu0
    %449 = vmatprep.mubr.f32.mxu0 0.0
    %450 = vmatmul.mubr.f32.gmra.mrb[0].mxu0 %v298
    %v451 = vpop.f32.mrb[0].mxu0
    %v452 = vadd.f32 %v323, %v451
    %v453 = vpop.f32.mrb[0].mxu0
    %454 = vmatprep.mubr.f32.mxu0 0.0
    %455 = vmatmul.mubr.f32.gmra.mrb[0].mxu0 %v299
    %v456 = vpop.f32.mrb[0].mxu0
    %v457 = vadd.f32 %v323, %v456
    %v458 = vpop.f32.mrb[0].mxu0
    %459 = vmatprep.mubr.f32.mxu0 0.0
    %460 = vmatmul.mubr.f32.gmra.mrb[0].mxu0 %v300
    %v461 = vpop.f32.mrb[0].mxu0
    %v462 = vadd.f32 %v323, %v461
    %v463 = vpop.f32.mrb[0].mxu0
    %464 = vmatprep.mubr.f32.mxu0 0.0
    %465 = vmatmul.mubr.f32.gmra.mrb[0].mxu0 %v301
    %v466 = vpop.f32.mrb[0].mxu0
    %v467 = vadd.f32 %v323, %v466
    %v468 = vpop.f32.mrb[0].mxu0
    %469 = vdwg.mxu0
    %v470 = vmax.f32 %v392, 0.0
    %v471 = vmax.f32 %v397, 0.0
    %v472 = vmax.f32 %v402, 0.0
    %v473 = vmax.f32 %v407, 0.0
    %v474 = vmax.f32 %v412, 0.0
    %v475 = vmax.f32 %v417, 0.0
    %v476 = vmax.f32 %v422, 0.0
    %v477 = vmax.f32 %v427, 0.0
    %v478 = vmax.f32 %v432, 0.0
    %v479 = vmax.f32 %v437, 0.0
    %v480 = vmax.f32 %v442, 0.0
    %v481 = vmax.f32 %v447, 0.0
    %v482 = vmax.f32 %v452, 0.0
    %v483 = vmax.f32 %v457, 0.0
    %v484 = vmax.f32 %v462, 0.0
    %v485 = vmax.f32 %v467, 0.0
    %v486 = vld [vmem:[%s5] sm:$0x1]
    %v488 = vlaneseq
    %v489 = vshrl.u32 %v488, 7
    %v490 = vsub.s32 0, %v489
    %v491 = vrot.slane %v486, %v490
    %v493 = vmul.f32 %v470, %v491
    %v494 = vmul.f32 %v471, %v491
    %v495 = vmul.f32 %v472, %v491
    %v496 = vmul.f32 %v473, %v491
    %v497 = vmul.f32 %v474, %v491
    %v498 = vmul.f32 %v475, %v491
    %v499 = vmul.f32 %v476, %v491
    %v500 = vmul.f32 %v477, %v491
    %v501 = vmul.f32 %v478, %v491
    %v502 = vmul.f32 %v479, %v491
    %v503 = vmul.f32 %v480, %v491
    %v504 = vmul.f32 %v481, %v491
    %v505 = vmul.f32 %v482, %v491
    %v506 = vmul.f32 %v483, %v491
    %v507 = vmul.f32 %v484, %v491
    %v508 = vmul.f32 %v485, %v491
    %509 = vadd.xlane.f32.xlu0 %v493
    %v510 = vpop.xlane.xlu0 %509
    %511 = vadd.xlane.f32.xlu0 %v494
    %v512 = vpop.xlane.xlu0 %511
    %513 = vadd.xlane.f32.xlu0 %v495
    %v514 = vpop.xlane.xlu0 %513
    %515 = vadd.xlane.f32.xlu0 %v496
    %v516 = vpop.xlane.xlu0 %515
    %517 = vadd.xlane.f32.xlu0 %v497
    %v518 = vpop.xlane.xlu0 %517
    %519 = vadd.xlane.f32.xlu0 %v498
    %v520 = vpop.xlane.xlu0 %519
    %521 = vadd.xlane.f32.xlu0 %v499
    %v522 = vpop.xlane.xlu0 %521
    %523 = vadd.xlane.f32.xlu0 %v500
    %v524 = vpop.xlane.xlu0 %523
    %525 = vadd.xlane.f32.xlu0 %v501
    %v526 = vpop.xlane.xlu0 %525
    %527 = vadd.xlane.f32.xlu0 %v502
    %v528 = vpop.xlane.xlu0 %527
    %529 = vadd.xlane.f32.xlu0 %v503
    %v530 = vpop.xlane.xlu0 %529
    %531 = vadd.xlane.f32.xlu0 %v504
    %v532 = vpop.xlane.xlu0 %531
    %533 = vadd.xlane.f32.xlu0 %v505
    %v534 = vpop.xlane.xlu0 %533
    %535 = vadd.xlane.f32.xlu0 %v506
    %v536 = vpop.xlane.xlu0 %535
    %537 = vadd.xlane.f32.xlu0 %v507
    %v538 = vpop.xlane.xlu0 %537
    %539 = vadd.xlane.f32.xlu0 %v508
    %v540 = vpop.xlane.xlu0 %539
    %v541 = vld [vmem:[#allocation2] sm:$0x1]
    %v543 = vlaneseq
    %v544 = vshrl.u32 %v543, 7
    %v545 = vsub.s32 0, %v544
    %v546 = vrot.slane %v541, %v545
    %v548 = vadd.f32 %v510, %v546
    %v549 = vadd.f32 %v512, %v546
    %v550 = vadd.f32 %v514, %v546
    %v551 = vadd.f32 %v516, %v546
    %v552 = vadd.f32 %v518, %v546
    %v553 = vadd.f32 %v520, %v546
    %v554 = vadd.f32 %v522, %v546
    %v555 = vadd.f32 %v524, %v546
    %v556 = vadd.f32 %v526, %v546
    %v557 = vadd.f32 %v528, %v546
    %v558 = vadd.f32 %v530, %v546
    %v559 = vadd.f32 %v532, %v546
    %v560 = vadd.f32 %v534, %v546
    %v561 = vadd.f32 %v536, %v546
    %v562 = vadd.f32 %v538, %v546
    %v563 = vadd.f32 %v540, %v546
    %565 = vset.pattern.permute.xlu0 0
    %566 = vperm.xlu0 %565, %v548
    %v567 = vpop.permute.xlu0 %566
    %570 = vset.pattern.permute.xlu0 0
    %571 = vperm.xlu0 %570, %v549
    %v572 = vpop.permute.xlu0 %571
    %575 = vset.pattern.permute.xlu0 0
    %576 = vperm.xlu0 %575, %v550
    %v577 = vpop.permute.xlu0 %576
    %580 = vset.pattern.permute.xlu0 0
    %581 = vperm.xlu0 %580, %v551
    %v582 = vpop.permute.xlu0 %581
    %585 = vset.pattern.permute.xlu0 0
    %586 = vperm.xlu0 %585, %v552
    %v587 = vpop.permute.xlu0 %586
    %590 = vset.pattern.permute.xlu0 0
    %591 = vperm.xlu0 %590, %v553
    %v592 = vpop.permute.xlu0 %591
    %595 = vset.pattern.permute.xlu0 0
    %596 = vperm.xlu0 %595, %v554
    %v597 = vpop.permute.xlu0 %596
    %600 = vset.pattern.permute.xlu0 0
    %601 = vperm.xlu0 %600, %v555
    %v602 = vpop.permute.xlu0 %601
    %605 = vset.pattern.permute.xlu0 0
    %606 = vperm.xlu0 %605, %v556
    %v607 = vpop.permute.xlu0 %606
    %610 = vset.pattern.permute.xlu0 0
    %611 = vperm.xlu0 %610, %v557
    %v612 = vpop.permute.xlu0 %611
    %615 = vset.pattern.permute.xlu0 0
    %616 = vperm.xlu0 %615, %v558
    %v617 = vpop.permute.xlu0 %616
    %620 = vset.pattern.permute.xlu0 0
    %621 = vperm.xlu0 %620, %v559
    %v622 = vpop.permute.xlu0 %621
    %625 = vset.pattern.permute.xlu0 0
    %626 = vperm.xlu0 %625, %v560
    %v627 = vpop.permute.xlu0 %626
    %630 = vset.pattern.permute.xlu0 0
    %631 = vperm.xlu0 %630, %v561
    %v632 = vpop.permute.xlu0 %631
    %635 = vset.pattern.permute.xlu0 0
    %636 = vperm.xlu0 %635, %v562
    %v637 = vpop.permute.xlu0 %636
    %640 = vset.pattern.permute.xlu0 0
    %641 = vperm.xlu0 %640, %v563
    %v642 = vpop.permute.xlu0 %641
    %644 = vst [vmem:[#allocation9] sm:$0xff] %v567
    %645 = vst [vmem:[#allocation9 + $0x8] sm:$0xff] %v572
    %646 = vst [vmem:[#allocation9 + $0x10] sm:$0xff] %v577
    %647 = vst [vmem:[#allocation9 + $0x18] sm:$0xff] %v582
    %648 = vst [vmem:[#allocation9 + $0x20] sm:$0xff] %v587
    %649 = vst [vmem:[#allocation9 + $0x28] sm:$0xff] %v592
    %650 = vst [vmem:[#allocation9 + $0x30] sm:$0xff] %v597
    %651 = vst [vmem:[#allocation9 + $0x38] sm:$0xff] %v602
    %652 = vst [vmem:[#allocation9 + $0x40] sm:$0xff] %v607
    %653 = vst [vmem:[#allocation9 + $0x48] sm:$0xff] %v612
    %654 = vst [vmem:[#allocation9 + $0x50] sm:$0xff] %v617
    %655 = vst [vmem:[#allocation9 + $0x58] sm:$0xff] %v622
    %656 = vst [vmem:[#allocation9 + $0x60] sm:$0xff] %v627
    %657 = vst [vmem:[#allocation9 + $0x68] sm:$0xff] %v632
    %658 = vst [vmem:[#allocation9 + $0x70] sm:$0xff] %v637
    %659 = vst [vmem:[#allocation9 + $0x78] sm:$0xff] %v642
    // Predicated region
    $region42: #{tpu_custom_call.1} parent=1 // pred_check
      _
    $region43: #{tpu_custom_call.1} parent=1 // pred_check_branch
      %661 = sbr.rel (0) target = $region45
    $region44: #{tpu_custom_call.1} parent=1 // pred_region
      %s663 = ssub.s32 2048, 2048
      %664 = vsyncadd [#allocation5], %s663
      %s665 = sshll.u32 [#allocation9], 4
      %s666 = int_to_ptr.vmem [resolvable:$true] %s665
      %671 = dma.vmem_to_hbm [thread:$0]  %s666, 2048, %s7, [#allocation5], 128, 128, 8
    $region45: #{tpu_custom_call.1} parent=1 // pred_fallthru
      _
    // Predicated region
    $region46: #{tpu_custom_call.1} parent=1 // pred_check
      _
    $region47: #{tpu_custom_call.1} parent=1 // pred_check_branch
      %673 = sbr.rel (0) target = $region49
    $region48: #{tpu_custom_call.1} parent=1 // pred_region
      %674 = dma.done [#allocation5], 2048
    $region49: #{tpu_custom_call.1} parent=1 // pred_fallthru
      _
    %675 = vsyncpa [#allocation4], 1
    %676 = vsyncpa [#allocation7], 1
    %677 = vsyncpa [#allocation5], 1

</llo_original>
